<compile_context>
chip_gen: v6e
topology: v6e:2x2x1
jax: 0.10.0
libtpu: 0.0.40
codegen_flags: <defaults>
</compile_context>

<pallas_src>
import functools

import jax
import jax.numpy as jnp
from jax import lax
from jax.experimental import pallas as pl
from jax.experimental.pallas import tpu as pltpu


def _layernorm_kernel(x_ref, o_ref, *, eps, inv_d):
    # x_ref, o_ref: (TILE_N, D) VMEM tiles.  Rows are normalized independently,
    # so any garbage rows in a partial boundary tile only produce garbage that
    # is masked on store.
    x = x_ref[...].astype(jnp.float32)

    # Fused single-pass statistics: one sweep over the tile yields both sums.
    s1 = jnp.sum(x, axis=1, keepdims=True)
    s2 = jnp.sum(x * x, axis=1, keepdims=True)

    mean = s1 * inv_d
    var = jnp.maximum(s2 * inv_d - mean * mean, 0.0)  # clamp cancellation error
    inv = lax.rsqrt(var + eps)                        # EUP slot, effectively free

    # Hoisted (TILE_N, 1) factors: per-element work is one mul + one sub.
    shift = mean * inv
    o_ref[...] = (x * inv - shift).astype(o_ref.dtype)


def _round_up(a, b):
    return ((a + b - 1) // b) * b


def my_layer_norm(x, eps=1e-5):
    """LayerNorm over x.shape[1:] with no weight/bias (MyLayerNorm.forward)."""
    orig_shape = x.shape
    n = x.shape[0]
    d = 1
    for s in x.shape[1:]:
        d *= s
    x2 = x.reshape(n, d)  # contiguous row-major reshape: free

    itemsize = jnp.dtype(x.dtype).itemsize

    # Sublane packing: 8 rows for 4-byte, 16 for 2-byte, 32 for 1-byte dtypes.
    row_mult = max(8, 32 // max(itemsize, 1))

    # Row-tile sizing: ~2 MiB of f32 working data per tile, multiple of
    # row_mult (or the full batch when it fits in a single block).
    budget_bytes = 2 * 1024 * 1024
    row_bytes_f32 = max(d, 128) * 4
    tile_n = max(row_mult, (budget_bytes // row_bytes_f32) // row_mult * row_mult)
    # TODO(synk): for extremely large D where even an 8-row block blows the
    # VMEM budget, add a second (arbitrary) grid axis over D with accumulated
    # s1/s2 scratch and a two-sweep finalize.

    if tile_n >= n:
        tile_n = n            # single block covering the full batch (always legal)
        grid = (1,)
    else:
        grid = (pl.cdiv(n, tile_n),)  # partial boundary block: masked writes

    kernel = functools.partial(
        _layernorm_kernel, eps=float(eps), inv_d=float(1.0 / d)
    )

    # Explicit VMEM budget: double-buffered in/out tiles plus the f32 working
    # copies; 32 MiB comfortably covers the ~2 MiB tiles on v5e/v6e/v7x.
    needed = 10 * tile_n * max(d, 128) * 4
    vmem_limit = min(max(32 * 1024 * 1024, needed), 120 * 1024 * 1024)

    out2 = pl.pallas_call(
        kernel,
        out_shape=jax.ShapeDtypeStruct((n, d), x.dtype),
        grid_spec=pltpu.PrefetchScalarGridSpec(
            num_scalar_prefetch=0,
            grid=grid,
            in_specs=[pl.BlockSpec((tile_n, d), lambda i: (i, 0))],
            out_specs=pl.BlockSpec((tile_n, d), lambda i: (i, 0)),
        ),
        compiler_params=pltpu.CompilerParams(
            dimension_semantics=("parallel",),
            vmem_limit_bytes=int(vmem_limit),
        ),
        cost_estimate=pl.CostEstimate(
            flops=5 * n * d,
            transcendentals=n,
            bytes_accessed=2 * n * d * itemsize,
        ),
    )(x2)

    return out2.reshape(orig_shape)


if __name__ == "__main__":
    key = jax.random.PRNGKey(0)
    # Shapes consistent with a BatchNorm2d feature map: (N, C, H, W)
    N, C, H, W = 2, 4, 16, 16
    x = jax.random.normal(key, (N, C, H, W), dtype=jnp.float32)

    eps = 1e-5  # torch BatchNorm default eps carried over by MyLayerNorm.__init__
    out = my_layer_norm(x, eps=eps)
    out = jax.block_until_ready(out)

    # Reference in plain JAX (same semantics as F.layer_norm over x.shape[1:]).
    xf = x.reshape(N, -1).astype(jnp.float32)
    mean = jnp.mean(xf, axis=1, keepdims=True)
    var = jnp.mean((xf - mean) ** 2, axis=1, keepdims=True)
    ref = ((xf - mean) / jnp.sqrt(var + eps)).reshape(x.shape)

    assert out.shape == x.shape and out.dtype == x.dtype
    assert jnp.max(jnp.abs(out - ref)) < 1e-4

    print("KERNEL_OK")
</pallas_src>

<mosaic_0001>
module attributes {stable_mosaic.version = 11 : i64} {
  func.func @_layernorm_kernel(%arg0: i32, %arg1: memref<2x1024xf32, #tpu.memory_space<vmem>>, %arg2: memref<2x1024xf32, #tpu.memory_space<vmem>>) attributes {dimension_semantics = [#tpu.dimension_semantics<parallel>], iteration_bounds = array<i64: 1>, scalar_prefetch = 0 : i64, scratch_operands = 0 : i64, tpu.core_type = #tpu.core_type<tc>, window_params = [{transform_indices = @transform_0, window_bounds = array<i64: 2, 1024>}, {transform_indices = @transform_1, window_bounds = array<i64: 2, 1024>}]} {
    %c0 = arith.constant 0 : index
    %c0_0 = arith.constant 0 : index
    %0 = vector.load %arg1[%c0, %c0_0] : memref<2x1024xf32, #tpu.memory_space<vmem>>, vector<2x1024xf32>
    %cst = arith.constant dense<0.000000e+00> : vector<2xf32>
    %1 = vector.multi_reduction <add>, %0, %cst [1] : vector<2x1024xf32> to vector<2xf32>
    %2 = vector.shape_cast %1 : vector<2xf32> to vector<2x1xf32>
    %3 = arith.mulf %0, %0 : vector<2x1024xf32>
    %cst_1 = arith.constant dense<0.000000e+00> : vector<2xf32>
    %4 = vector.multi_reduction <add>, %3, %cst_1 [1] : vector<2x1024xf32> to vector<2xf32>
    %5 = vector.shape_cast %4 : vector<2xf32> to vector<2x1xf32>
    %cst_2 = arith.constant 9.765625E-4 : f32
    %6 = vector.broadcast %cst_2 : f32 to vector<2x1xf32>
    %7 = arith.mulf %2, %6 : vector<2x1xf32>
    %cst_3 = arith.constant 9.765625E-4 : f32
    %8 = vector.broadcast %cst_3 : f32 to vector<2x1xf32>
    %9 = arith.mulf %5, %8 : vector<2x1xf32>
    %10 = arith.mulf %7, %7 : vector<2x1xf32>
    %11 = arith.subf %9, %10 : vector<2x1xf32>
    %cst_4 = arith.constant 0.000000e+00 : f32
    %12 = vector.broadcast %cst_4 : f32 to vector<2x1xf32>
    %13 = arith.maximumf %11, %12 : vector<2x1xf32>
    %cst_5 = arith.constant 9.99999974E-6 : f32
    %14 = vector.broadcast %cst_5 : f32 to vector<2x1xf32>
    %15 = arith.addf %13, %14 : vector<2x1xf32>
    %16 = math.rsqrt %15 : vector<2x1xf32>
    %17 = arith.mulf %7, %16 : vector<2x1xf32>
    %18 = vector.broadcast %16 : vector<2x1xf32> to vector<2x1024xf32>
    %19 = arith.mulf %0, %18 : vector<2x1024xf32>
    %20 = vector.broadcast %17 : vector<2x1xf32> to vector<2x1024xf32>
    %21 = arith.subf %19, %20 : vector<2x1024xf32>
    %c0_6 = arith.constant 0 : index
    %c0_7 = arith.constant 0 : index
    %22 = vector.load %arg2[%c0_6, %c0_7] : memref<2x1024xf32, #tpu.memory_space<vmem>>, vector<2x1024xf32>
    tpu.vector_store %arg2[%c0_6, %c0_7], %21 {strides = array<i32>} : memref<2x1024xf32, #tpu.memory_space<vmem>>, vector<2x1024xf32>,
    return
  }
  func.func @transform_0(%arg0: i32) -> (i32, i32) {
    %c0_i32 = arith.constant 0 : i32
    %c0_i32_0 = arith.constant 0 : i32
    return %arg0, %c0_i32 : i32, i32
  }
  func.func @transform_1(%arg0: i32) -> (i32, i32) {
    %c0_i32 = arith.constant 0 : i32
    %c0_i32_0 = arith.constant 0 : i32
    return %arg0, %c0_i32 : i32, i32
  }
}

</mosaic_0001>

<llo_original>
// kernel: tpu_custom_call.1
$region0: #{tpu_custom_call.1}
  #allocation0 [shape = 'u32[]', space=smem, size = 0x4, offset = 0x4, fixed_abs, tag = 'smem constant byte address 0x4 - core index']
  #allocation1 [shape = 'u32[144,128]{1,0:T(1,128)}', space=vmem, size = 0x12000, scoped, tag = 'internal scratch']
  %s0 = inlined_call_operand.hbm [shape: f32[2,1024], index: 0, kind: input, shape index: {}]
  %s1 = inlined_call_operand.hbm [shape: f32[2,1024], index: 1, kind: output, shape index: {}]
  %s2 = sld [smem:[#allocation0]]
  $region18: #{tpu_custom_call.1} parent=0
    _
  %s4 = ssub.s32 1, %s2
  %s5 = scalar_select 0, %s4, %s2
  $region1: #{tpu_custom_call.1} parent=0
    #allocation2 [shape = 'u8[8192]{0}', space=vmem, size = 0x2000, scoped, tag = 'input window, operand 0, single buffered']
    #allocation3 [shape = 's32[1]{0}', space=sflag, size = 0x4, scoped, tag = 'scoped memory for tpu_custom_call.1']
    #allocation4 [shape = 's32[1]{0}', space=sflag, size = 0x4, scoped, tag = 'scoped memory for tpu_custom_call.1']
    #allocation5 [shape = 'u8[8192]{0}', space=vmem, size = 0x2000, scoped, tag = 'output window, operand 0, single buffered']
    %6 = vsyncpa [#allocation3], 0
    %7 = vsyncpa [#allocation4], 0
    // Predicated region
    $region2: #{tpu_custom_call.1} parent=1 // pred_check
      _
    $region3: #{tpu_custom_call.1} parent=1 // pred_check_branch
      %9 = sbr.rel (0) target = $region5
    $region4: #{tpu_custom_call.1} parent=1 // pred_region
      %s11 = ssub.s32 256, 256
      %12 = vsyncadd [#allocation3], %s11
      %s14 = sshll.u32 [#allocation2], 4
      %s15 = int_to_ptr.vmem [resolvable:$true] %s14
      %17 = dma.hbm_to_vmem [thread:$0]  %s0, 256, %s15, [#allocation3]
    $region5: #{tpu_custom_call.1} parent=1 // pred_fallthru
      _
    // Predicated region
    $region6: #{tpu_custom_call.1} parent=1 // pred_check
      _
    $region7: #{tpu_custom_call.1} parent=1 // pred_check_branch
      %19 = sbr.rel (0) target = $region9
    $region8: #{tpu_custom_call.1} parent=1 // pred_region
      %20 = dma.done [#allocation3], 256
    $region9: #{tpu_custom_call.1} parent=1 // pred_fallthru
      _
    %v21 = vld [vmem:[#allocation2] sm:$0xff]
    %v22 = vld [vmem:[#allocation2 + $0x8] sm:$0xff]
    %v25 = vcombine.high %v21, %v21
    %v27 = vunpack.c.l.s4 1983009808
    %v28 = vunpack.c.0.s8 %v27
    %v29 = vlaneseq
    %v30 = vshrl.u32 %v29, 7
    %v31 = vsub.s32 %v28, %v30
    %v32 = vrot.slane %v21, %v31
    %v34 = vunpack.c.l.s4 1983009808
    %v35 = vunpack.c.0.s8 %v34
    %v36 = vlaneseq
    %v37 = vshrl.u32 %v36, 7
    %v38 = vsub.s32 %v35, %v37
    %v39 = vrot.slane %v25, %v38
    %v40 = vcombine.high %v32, %v32
    %v41 = vcombine.high %v39, %v39
    %v42 = vcombine.high %v22, %v22
    %v44 = vunpack.c.l.s4 1983009808
    %v45 = vunpack.c.0.s8 %v44
    %v46 = vlaneseq
    %v47 = vshrl.u32 %v46, 7
    %v48 = vsub.s32 %v45, %v47
    %v49 = vrot.slane %v22, %v48
    %v51 = vunpack.c.l.s4 1983009808
    %v52 = vunpack.c.0.s8 %v51
    %v53 = vlaneseq
    %v54 = vshrl.u32 %v53, 7
    %v55 = vsub.s32 %v52, %v54
    %v56 = vrot.slane %v42, %v55
    %v57 = vcombine.high %v49, %v49
    %v58 = vcombine.high %v56, %v56
    %vm67 = vcmask 1041408
    %v68 = vsel %vm67, %v32, 0.0
    %v69 = vsel %vm67, %v40, 0.0
    %v70 = vadd.f32 %v68, %v69
    %v71 = vsel %vm67, %v39, 0.0
    %v72 = vadd.f32 %v70, %v71
    %v73 = vsel %vm67, %v41, 0.0
    %v74 = vadd.f32 %v72, %v73
    %v75 = vsel %vm67, %v49, 0.0
    %v76 = vadd.f32 %v74, %v75
    %v77 = vsel %vm67, %v57, 0.0
    %v78 = vadd.f32 %v76, %v77
    %v79 = vsel %vm67, %v56, 0.0
    %v80 = vadd.f32 %v78, %v79
    %v81 = vsel %vm67, %v58, 0.0
    %v82 = vadd.f32 %v80, %v81
    %83 = vadd.xlane.f32.xlu0 %v82
    %v84 = vpop.xlane.xlu0 %83
    %v85 = vmul.f32 %v21, %v21
    %v86 = vmul.f32 %v22, %v22
    %v89 = vcombine.high %v85, %v85
    %v91 = vunpack.c.l.s4 1983009808
    %v92 = vunpack.c.0.s8 %v91
    %v93 = vlaneseq
    %v94 = vshrl.u32 %v93, 7
    %v95 = vsub.s32 %v92, %v94
    %v96 = vrot.slane %v85, %v95
    %v98 = vunpack.c.l.s4 1983009808
    %v99 = vunpack.c.0.s8 %v98
    %v100 = vlaneseq
    %v101 = vshrl.u32 %v100, 7
    %v102 = vsub.s32 %v99, %v101
    %v103 = vrot.slane %v89, %v102
    %v104 = vcombine.high %v96, %v96
    %v105 = vcombine.high %v103, %v103
    %v106 = vcombine.high %v86, %v86
    %v108 = vunpack.c.l.s4 1983009808
    %v109 = vunpack.c.0.s8 %v108
    %v110 = vlaneseq
    %v111 = vshrl.u32 %v110, 7
    %v112 = vsub.s32 %v109, %v111
    %v113 = vrot.slane %v86, %v112
    %v115 = vunpack.c.l.s4 1983009808
    %v116 = vunpack.c.0.s8 %v115
    %v117 = vlaneseq
    %v118 = vshrl.u32 %v117, 7
    %v119 = vsub.s32 %v116, %v118
    %v120 = vrot.slane %v106, %v119
    %v121 = vcombine.high %v113, %v113
    %v122 = vcombine.high %v120, %v120
    %v131 = vsel %vm67, %v96, 0.0
    %v132 = vsel %vm67, %v104, 0.0
    %v133 = vadd.f32 %v131, %v132
    %v134 = vsel %vm67, %v103, 0.0
    %v135 = vadd.f32 %v133, %v134
    %v136 = vsel %vm67, %v105, 0.0
    %v137 = vadd.f32 %v135, %v136
    %v138 = vsel %vm67, %v113, 0.0
    %v139 = vadd.f32 %v137, %v138
    %v140 = vsel %vm67, %v121, 0.0
    %v141 = vadd.f32 %v139, %v140
    %v142 = vsel %vm67, %v120, 0.0
    %v143 = vadd.f32 %v141, %v142
    %v144 = vsel %vm67, %v122, 0.0
    %v145 = vadd.f32 %v143, %v144
    %146 = vadd.xlane.f32.xlu0 %v145
    %v147 = vpop.xlane.xlu0 %146
    %v148 = vmul.f32 %v84, 0.0009765625
    %v149 = vmul.f32 %v147, 0.0009765625
    %v150 = vmul.f32 %v148, %v148
    %v151 = vsub.f32 %v149, %v150
    %v152 = vmax.f32 %v151, 0.0
    %v153 = vadd.f32 %v152, 1e-05
    %v154 = vrsqrt.pop %v153
    %v155 = vmul.f32 %v148, %v154
    %v158 = vunpack.c.l.s4 269488144
    %v159 = vunpack.c.0.s8 %v158
    %v160 = vlaneseq
    %v161 = vshrl.u32 %v160, 7
    %v162 = vsub.s32 %v159, %v161
    %v163 = vrot.slane %v154, %v162
    %v165 = vmul.f32 %v21, %v163
    %v166 = vmul.f32 %v22, %v163
    %v169 = vunpack.c.l.s4 269488144
    %v170 = vunpack.c.0.s8 %v169
    %v171 = vlaneseq
    %v172 = vshrl.u32 %v171, 7
    %v173 = vsub.s32 %v170, %v172
    %v174 = vrot.slane %v155, %v173
    %v176 = vsub.f32 %v165, %v174
    %v177 = vsub.f32 %v166, %v174
    %178 = vst [vmem:[#allocation5] sm:$0xff] %v176
    %179 = vst [vmem:[#allocation5 + $0x8] sm:$0xff] %v177
    // Predicated region
    $region10: #{tpu_custom_call.1} parent=1 // pred_check
      _
    $region11: #{tpu_custom_call.1} parent=1 // pred_check_branch
      %181 = sbr.rel (0) target = $region13
    $region12: #{tpu_custom_call.1} parent=1 // pred_region
      %s183 = ssub.s32 256, 256
      %184 = vsyncadd [#allocation4], %s183
      %s186 = sshll.u32 [#allocation5], 4
      %s187 = int_to_ptr.vmem [resolvable:$true] %s186
      %189 = dma.vmem_to_hbm [thread:$0]  %s187, 256, %s1, [#allocation4]
    $region13: #{tpu_custom_call.1} parent=1 // pred_fallthru
      _
    // Predicated region
    $region14: #{tpu_custom_call.1} parent=1 // pred_check
      _
    $region15: #{tpu_custom_call.1} parent=1 // pred_check_branch
      %191 = sbr.rel (0) target = $region17
    $region16: #{tpu_custom_call.1} parent=1 // pred_region
      %192 = dma.done [#allocation4], 256
    $region17: #{tpu_custom_call.1} parent=1 // pred_fallthru
      _
    %193 = vsyncpa [#allocation3], 1
    %194 = vsyncpa [#allocation4], 1

</llo_original>
